<compile_context>
chip_gen: v6e
topology: v6e:2x2x1
jax: 0.10.0
libtpu: 0.0.40
codegen_flags: <defaults>
</compile_context>

<pallas_src>
import functools

import jax
import jax.numpy as jnp
import numpy as np
from jax.experimental import pallas as pl
from jax.experimental.pallas import tpu as pltpu


def _round_up(x, m):
    return (x + m - 1) // m * m


def _default_block_cols(n, c):
    """Batch rows per grid step for the class-major (C, N) layout.

    Budget ~2 MiB of f32 logits per pipeline buffer (double-buffered by the
    BlockSpec pipeline -> ~4 MiB), which fits the scoped-VMEM defaults on all
    of v5e / v6e / v7x while still amortizing the ~0.35us per-grid-step cost.
    """
    c_sub = _round_up(max(c, 1), 8)                 # class axis lives on sublanes
    budget = 2 << 20                                # bytes of f32 logits / buffer
    cols = max(128, (budget // (4 * c_sub)) // 128 * 128)
    if n > 256:
        # Keep >= 2 grid steps so both v7x TensorCores get work and the
        # pipeline can overlap DMA with compute.
        cols = min(cols, _round_up(pl.cdiv(n, 2), 128))
    return cols
    # TODO(synk): vocab-scale C (where even 128 columns exceed the VMEM budget)
    # needs a second 'arbitrary' grid axis over C with an online logsumexp.


def _focal_kernel(gamma, n_valid, has_weights, per_elem, *refs):
    if has_weights:
        logits_ref, targets_ref, alpha_ref, out_ref = refs
    else:
        logits_ref, targets_ref, out_ref = refs
        alpha_ref = None

    xt = logits_ref[...].astype(jnp.float32)              # (C, TILE_N) lane-dense
    c, tile_n = xt.shape
    t = targets_ref[...]                                   # (1, TILE_N) int32

    # Fused log-softmax + gather (no full probs materialization).
    m = jnp.max(xt, axis=0, keepdims=True)                 # (1, TILE_N)
    lse = jnp.log(jnp.sum(jnp.exp(xt - m), axis=0, keepdims=True))
    class_ids = jax.lax.broadcasted_iota(jnp.int32, (c, tile_n), 0)
    x_sel = jnp.sum(jnp.where(class_ids == t, xt, 0.0),    # gathered target logit
                    axis=0, keepdims=True)
    log_p = x_sel - m - lse                                 # log p_t, (1, TILE_N)
    p_t = jnp.exp(log_p)

    one_minus = 1.0 - p_t
    g_int = int(gamma)
    if gamma == g_int and 0 <= g_int <= 8:
        # integer gamma (default 2.0): keep it off the transcendental path
        mod = jnp.ones_like(p_t)
        for _ in range(g_int):
            mod = mod * one_minus
    else:
        mod = jnp.exp(gamma * jnp.log1p(-p_t))
    focal = -mod * log_p                                    # (1, TILE_N)

    if has_weights:
        focal = alpha_ref[...].astype(jnp.float32) * focal  # weights[targets]

    # Ragged last tile: zero out-of-range columns so garbage never reaches the
    # reduction / output (jnp.where does not propagate NaN/Inf from the
    # unselected branch).
    if n_valid % tile_n != 0:
        base = pl.program_id(0) * tile_n
        cols = base + jax.lax.broadcasted_iota(jnp.int32, (1, tile_n), 1)
        focal = jnp.where(cols < n_valid, focal, 0.0)

    if per_elem:
        out_ref[...] = focal                                # lane-dense (1, TILE_N)
    else:
        # one 128-lane slot per tile; partial sum in lane 0, zeros elsewhere
        lanes = jax.lax.broadcasted_iota(jnp.int32, (1, 128), 1)
        out_ref[...] = jnp.where(lanes == 0, jnp.sum(focal), 0.0)


def focal_loss(logits, targets, weights=None, gamma=2.0, reduction="mean",
               block_cols=None):
    """logits: (N, C) float; targets: (N,) int; weights: optional (C,) float."""
    n, c = logits.shape

    tile_n = _default_block_cols(n, c) if block_cols is None else int(block_cols)
    if tile_n >= n:
        tile_n = n                                      # single full-extent block
        num_tiles = 1
    else:
        tile_n = _round_up(tile_n, 128)                 # lane-aligned tiles
        num_tiles = pl.cdiv(n, tile_n)                  # ragged edge masked in-kernel

    # Class-major, lane-dense logits (native dtype; widened per tile in-kernel).
    logits_cn = jnp.transpose(logits, (1, 0))           # (C, N)
    targets_row = targets.astype(jnp.int32).reshape(1, n)

    in_specs = [
        pl.BlockSpec((c, tile_n), lambda i: (0, i)),     # dense logits tile
        pl.BlockSpec((1, tile_n), lambda i: (0, i)),     # targets slice
    ]
    args = [logits_cn, targets_row]

    has_weights = weights is not None
    if has_weights:
        # Gather alpha = weights[targets] in the wrapper (O(N), fuses with the
        # targets reshape) and feed it lane-dense.
        alpha_row = jnp.take(weights.astype(jnp.float32),
                             targets.astype(jnp.int32)).reshape(1, n)
        in_specs.append(pl.BlockSpec((1, tile_n), lambda i: (0, i)))
        args.append(alpha_row)

    per_elem = reduction == "none"
    if per_elem:
        out_shape = jax.ShapeDtypeStruct((1, n), jnp.float32)
        out_specs = pl.BlockSpec((1, tile_n), lambda i: (0, i))
    else:
        out_shape = jax.ShapeDtypeStruct((1, num_tiles * 128), jnp.float32)
        out_specs = pl.BlockSpec((1, 128), lambda i: (0, i))

    kernel = functools.partial(_focal_kernel, float(gamma), n, has_weights,
                               per_elem)
    out = pl.pallas_call(
        kernel,
        grid=(num_tiles,),
        in_specs=in_specs,
        out_specs=out_specs,
        out_shape=out_shape,
        compiler_params=pltpu.CompilerParams(
            dimension_semantics=("parallel",)),
    )(*args)

    if per_elem:
        return out[0, :n]
    total = jnp.sum(out)                                 # per-tile partials
    if reduction == "sum":
        return total
    return total / n                                     # true batch size


def _reference(logits, targets, weights=None, gamma=2.0, reduction="mean"):
    probs = jax.nn.softmax(logits.astype(jnp.float32), axis=1)
    p_t = jnp.take_along_axis(probs, targets.reshape(-1, 1), axis=1)[:, 0]
    fl = -((1.0 - p_t) ** gamma) * jnp.log(p_t)
    if weights is not None:
        fl = weights[targets] * fl
    if reduction == "mean":
        return fl.mean()
    if reduction == "sum":
        return fl.sum()
    return fl


if __name__ == "__main__":
    key = jax.random.PRNGKey(0)
    k1, k2 = jax.random.split(key)

    # Small shapes consistent with the module: batch=32, classes=8.
    N, C = 32, 8
    logits = jax.random.normal(k1, (N, C), dtype=jnp.float32)
    targets = jax.random.randint(k2, (N,), 0, C, dtype=jnp.int32)
    weights = jnp.linspace(0.5, 1.5, C, dtype=jnp.float32)

    out = jax.block_until_ready(focal_loss(logits, targets, weights, 2.0, "mean"))
    np.testing.assert_allclose(
        np.asarray(out),
        np.asarray(_reference(logits, targets, weights, 2.0, "mean")),
        rtol=1e-5, atol=1e-6)

    # Other reductions, no-weights and non-integer gamma paths.
    for red in ("sum", "none"):
        got = jax.block_until_ready(focal_loss(logits, targets, weights, 2.0, red))
        np.testing.assert_allclose(
            np.asarray(got),
            np.asarray(_reference(logits, targets, weights, 2.0, red)),
            rtol=1e-5, atol=1e-6)
    got = jax.block_until_ready(focal_loss(logits, targets, None, 1.5, "mean"))
    np.testing.assert_allclose(
        np.asarray(got),
        np.asarray(_reference(logits, targets, None, 1.5, "mean")),
        rtol=1e-5, atol=1e-6)

    # Tiled + ragged path: multi-step grid, N not a multiple of the block,
    # no wrapper-side padding (in-kernel mask handles the ragged last tile).
    N2 = 1000
    l2 = jax.random.normal(k1, (N2, C), dtype=jnp.float32)
    t2 = jax.random.randint(k2, (N2,), 0, C, dtype=jnp.int32)
    got = jax.block_until_ready(
        focal_loss(l2, t2, weights, gamma=2.0, reduction="mean", block_cols=256))
    np.testing.assert_allclose(
        np.asarray(got),
        np.asarray(_reference(l2, t2, weights, 2.0, "mean")),
        rtol=1e-5, atol=1e-6)

    # bf16 logits stay bf16 through HBM->VMEM and are widened per tile in-kernel.
    l2_bf16 = l2.astype(jnp.bfloat16)
    got = jax.block_until_ready(focal_loss(l2_bf16, t2, weights, 2.0, "mean"))
    np.testing.assert_allclose(
        np.asarray(got),
        np.asarray(_reference(l2_bf16, t2, weights, 2.0, "mean")),
        rtol=1e-4, atol=1e-5)

    print("KERNEL_OK")
</pallas_src>

<mosaic_0001>
module attributes {stable_mosaic.version = 11 : i64} {
  func.func @_focal_kernel(%arg0: i32, %arg1: memref<8x32xf32, #tpu.memory_space<vmem>>, %arg2: memref<1x32xi32, #tpu.memory_space<vmem>>, %arg3: memref<1x32xf32, #tpu.memory_space<vmem>>, %arg4: memref<1x128xf32, #tpu.memory_space<vmem>>) attributes {dimension_semantics = [#tpu.dimension_semantics<parallel>], iteration_bounds = array<i64: 1>, scalar_prefetch = 0 : i64, scratch_operands = 0 : i64, tpu.core_type = #tpu.core_type<tc>, window_params = [{transform_indices = @transform_0, window_bounds = array<i64: 8, 32>}, {transform_indices = @transform_1, window_bounds = array<i64: 1, 32>}, {transform_indices = @transform_2, window_bounds = array<i64: 1, 32>}, {transform_indices = @transform_3, window_bounds = array<i64: 1, 128>}]} {
    %c0 = arith.constant 0 : index
    %c0_0 = arith.constant 0 : index
    %0 = vector.load %arg1[%c0, %c0_0] : memref<8x32xf32, #tpu.memory_space<vmem>>, vector<8x32xf32>
    %c0_1 = arith.constant 0 : index
    %c0_2 = arith.constant 0 : index
    %1 = vector.load %arg2[%c0_1, %c0_2] : memref<1x32xi32, #tpu.memory_space<vmem>>, vector<1x32xi32>
    %cst = arith.constant dense<0xFF800000> : vector<32xf32>
    %2 = vector.multi_reduction <maximumf>, %0, %cst [0] : vector<8x32xf32> to vector<32xf32>
    %3 = vector.shape_cast %2 : vector<32xf32> to vector<1x32xf32>
    %4 = vector.broadcast %3 : vector<1x32xf32> to vector<8x32xf32>
    %5 = arith.subf %0, %4 : vector<8x32xf32>
    %6 = math.exp %5 : vector<8x32xf32>
    %cst_3 = arith.constant dense<0.000000e+00> : vector<32xf32>
    %7 = vector.multi_reduction <add>, %6, %cst_3 [0] : vector<8x32xf32> to vector<32xf32>
    %8 = vector.shape_cast %7 : vector<32xf32> to vector<1x32xf32>
    %9 = math.log %8 : vector<1x32xf32>
    %10 = tpu.iota {dimensions = array<i32: 0>} : vector<8x32xi32>
    %11 = vector.broadcast %1 : vector<1x32xi32> to vector<8x32xi32>
    %12 = arith.cmpi eq, %10, %11 : vector<8x32xi32>
    %cst_4 = arith.constant 0.000000e+00 : f32
    %13 = vector.broadcast %cst_4 : f32 to vector<8x32xf32>
    %14 = arith.select %12, %0, %13 : vector<8x32xi1>, vector<8x32xf32>
    %cst_5 = arith.constant dense<0.000000e+00> : vector<32xf32>
    %15 = vector.multi_reduction <add>, %14, %cst_5 [0] : vector<8x32xf32> to vector<32xf32>
    %16 = vector.shape_cast %15 : vector<32xf32> to vector<1x32xf32>
    %17 = arith.subf %16, %3 : vector<1x32xf32>
    %18 = arith.subf %17, %9 : vector<1x32xf32>
    %19 = math.exp %18 : vector<1x32xf32>
    %cst_6 = arith.constant 1.000000e+00 : f32
    %20 = vector.broadcast %cst_6 : f32 to vector<1x32xf32>
    %21 = arith.subf %20, %19 : vector<1x32xf32>
    %cst_7 = arith.constant 1.000000e+00 : f32
    %22 = vector.broadcast %cst_7 : f32 to vector<1x32xf32>
    %23 = arith.mulf %22, %21 : vector<1x32xf32>
    %24 = arith.mulf %23, %21 : vector<1x32xf32>
    %cst_8 = arith.constant 0.000000e+00 : f32
    %25 = vector.broadcast %cst_8 : f32 to vector<1x32xf32>
    %26 = arith.subf %25, %24 : vector<1x32xf32>
    %27 = arith.mulf %26, %18 : vector<1x32xf32>
    %c0_9 = arith.constant 0 : index
    %c0_10 = arith.constant 0 : index
    %28 = vector.load %arg3[%c0_9, %c0_10] : memref<1x32xf32, #tpu.memory_space<vmem>>, vector<1x32xf32>
    %29 = arith.mulf %28, %27 : vector<1x32xf32>
    %30 = tpu.iota {dimensions = array<i32: 1>} : vector<1x128xi32>
    %c0_i32 = arith.constant 0 : i32
    %31 = vector.broadcast %c0_i32 : i32 to vector<1x128xi32>
    %32 = arith.cmpi eq, %30, %31 : vector<1x128xi32>
    %33 = vector.shape_cast %29 : vector<1x32xf32> to vector<1x1x32xf32>
    %cst_11 = arith.constant dense<0.000000e+00> : vector<1xf32>
    %34 = vector.multi_reduction <add>, %33, %cst_11 [1, 2] : vector<1x1x32xf32> to vector<1xf32>
    %35 = vector.shape_cast %34 : vector<1xf32> to vector<1x1x1xf32>
    %36 = vector.extract %35[0, 0, 0] : f32 from vector<1x1x1xf32>
    %cst_12 = arith.constant 0.000000e+00 : f32
    %37 = vector.broadcast %36 : f32 to vector<1x128xf32>
    %38 = vector.broadcast %cst_12 : f32 to vector<1x128xf32>
    %39 = arith.select %32, %37, %38 : vector<1x128xi1>, vector<1x128xf32>
    %c0_13 = arith.constant 0 : index
    %c0_14 = arith.constant 0 : index
    %40 = vector.load %arg4[%c0_13, %c0_14] : memref<1x128xf32, #tpu.memory_space<vmem>>, vector<1x128xf32>
    tpu.vector_store %arg4[%c0_13, %c0_14], %39 {strides = array<i32>} : memref<1x128xf32, #tpu.memory_space<vmem>>, vector<1x128xf32>,
    return
  }
  func.func @transform_0(%arg0: i32) -> (i32, i32) {
    %c0_i32 = arith.constant 0 : i32
    %c0_i32_0 = arith.constant 0 : i32
    return %c0_i32, %arg0 : i32, i32
  }
  func.func @transform_1(%arg0: i32) -> (i32, i32) {
    %c0_i32 = arith.constant 0 : i32
    %c0_i32_0 = arith.constant 0 : i32
    return %c0_i32, %arg0 : i32, i32
  }
  func.func @transform_2(%arg0: i32) -> (i32, i32) {
    %c0_i32 = arith.constant 0 : i32
    %c0_i32_0 = arith.constant 0 : i32
    return %c0_i32, %arg0 : i32, i32
  }
  func.func @transform_3(%arg0: i32) -> (i32, i32) {
    %c0_i32 = arith.constant 0 : i32
    %c0_i32_0 = arith.constant 0 : i32
    return %c0_i32, %arg0 : i32, i32
  }
}

</mosaic_0001>

<llo_original>
// kernel: tpu_custom_call.1
$region0: #{tpu_custom_call.1}
  #allocation0 [shape = 'u32[]', space=smem, size = 0x4, offset = 0x4, fixed_abs, tag = 'smem constant byte address 0x4 - core index']
  #allocation1 [shape = 'u32[144,128]{1,0:T(1,128)}', space=vmem, size = 0x12000, scoped, tag = 'internal scratch']
  %s0 = inlined_call_operand.hbm [shape: f32[8,32], index: 0, kind: input, shape index: {}]
  %s1 = inlined_call_operand.vmem [shape: s32[1,32], index: 1, kind: input, shape index: {}]
  %s2 = inlined_call_operand.vmem [shape: f32[1,32], index: 2, kind: input, shape index: {}]
  %s3 = inlined_call_operand.hbm [shape: f32[1,128], index: 3, kind: output, shape index: {}]
  %s4 = sld [smem:[#allocation0]]
  $region26: #{tpu_custom_call.1} parent=0
    _
  %s6 = ssub.s32 1, %s4
  %s7 = scalar_select 0, %s6, %s4
  $region1: #{tpu_custom_call.1} parent=0
    #allocation2 [shape = 'u8[4096]{0}', space=vmem, size = 0x1000, scoped, tag = 'input window, operand 0, single buffered']
    #allocation3 [shape = 's32[1]{0}', space=sflag, size = 0x4, scoped, tag = 'scoped memory for tpu_custom_call.1']
    #allocation4 [shape = 's32[1]{0}', space=sflag, size = 0x4, scoped, tag = 'scoped memory for tpu_custom_call.1']
    #allocation5 [shape = 'u8[512]{0}', space=vmem, size = 0x400, scoped, tag = 'output window, operand 0, single buffered']
    %8 = vsyncpa [#allocation3], 0
    %9 = vsyncpa [#allocation4], 0
    // Predicated region
    $region2: #{tpu_custom_call.1} parent=1 // pred_check
      _
    $region3: #{tpu_custom_call.1} parent=1 // pred_check_branch
      %11 = sbr.rel (0) target = $region5
    $region4: #{tpu_custom_call.1} parent=1 // pred_region
      %s13 = ssub.s32 128, 128
      %14 = vsyncadd [#allocation3], %s13
      %s16 = sshll.u32 [#allocation2], 4
      %s17 = int_to_ptr.vmem [resolvable:$true] %s16
      %19 = dma.hbm_to_vmem [thread:$0]  %s0, 128, %s17, [#allocation3]
    $region5: #{tpu_custom_call.1} parent=1 // pred_fallthru
      _
    // Predicated region
    $region6: #{tpu_custom_call.1} parent=1 // pred_check
      _
    $region7: #{tpu_custom_call.1} parent=1 // pred_check_branch
      %21 = sbr.rel (0) target = $region9
    $region8: #{tpu_custom_call.1} parent=1 // pred_region
      _
    $region9: #{tpu_custom_call.1} parent=1 // pred_fallthru
      _
    // Predicated region
    $region10: #{tpu_custom_call.1} parent=1 // pred_check
      _
    $region11: #{tpu_custom_call.1} parent=1 // pred_check_branch
      %23 = sbr.rel (0) target = $region13
    $region12: #{tpu_custom_call.1} parent=1 // pred_region
      _
    $region13: #{tpu_custom_call.1} parent=1 // pred_fallthru
      _
    // Predicated region
    $region14: #{tpu_custom_call.1} parent=1 // pred_check
      _
    $region15: #{tpu_custom_call.1} parent=1 // pred_check_branch
      %25 = sbr.rel (0) target = $region17
    $region16: #{tpu_custom_call.1} parent=1 // pred_region
      %26 = dma.done [#allocation3], 128
    $region17: #{tpu_custom_call.1} parent=1 // pred_fallthru
      _
    %v27 = vld [vmem:[#allocation2] sm:$0xff]
    %v28 = vld [vmem:[%s1] sm:$0x1]
    %vm29 = vcmask 261120
    %v30 = vsel %vm29, %v27, -inf
    %v31 = vrot.slane %v30, 4
    %v32 = vmax.f32 %v30, %v31
    %v33 = vrot.slane %v32, 2
    %v34 = vmax.f32 %v32, %v33
    %v35 = vrot.slane %v34, 1
    %v36 = vmax.f32 %v34, %v35
    %v37 = vsub.f32 %v27, %v36
    %v38 = vmul.f32 %v37, 1.442695
    %v39 = vpow.pop %v38
    %v40 = vsel %vm29, %v39, 0.0
    %v41 = vrot.slane %v40, 4
    %v42 = vadd.f32 %v40, %v41
    %v43 = vrot.slane %v42, 2
    %v44 = vadd.f32 %v42, %v43
    %v45 = vrot.slane %v44, 1
    %v46 = vadd.f32 %v44, %v45
    %v47 = vlog2.pop %v46
    %v48 = vmul.f32 %v47, 0.6931472
    %v49 = vlaneseq
    %v50 = vshrl.u32 %v49, 7
    %v51 = vlaneseq
    %v52 = vshrl.u32 %v51, 7
    %v53 = vsub.s32 0, %v52
    %v54 = vrot.slane %v28, %v53
    %vm55 = vcmp.eq.s32.totalorder %v50, %v54
    %v56 = vsel %vm55, %v27, 0.0
    %v57 = vsel %vm29, %v56, 0.0
    %v58 = vrot.slane %v57, 4
    %v59 = vadd.f32 %v57, %v58
    %v60 = vrot.slane %v59, 2
    %v61 = vadd.f32 %v59, %v60
    %v62 = vrot.slane %v61, 1
    %v63 = vadd.f32 %v61, %v62
    %v64 = vsub.f32 %v63, %v36
    %v65 = vsub.f32 %v64, %v48
    %v66 = vmul.f32 %v65, 1.442695
    %v67 = vpow.pop %v66
    %v68 = vsub.f32 1.0, %v67
    %v69 = vmul.f32 %v68, %v68
    %v70 = vsub.f32 0.0, %v69
    %v71 = vmul.f32 %v70, %v65
    %v72 = vld [vmem:[%s2] sm:$0x1]
    %v73 = vmul.f32 %v72, %v71
    %v74 = vlaneseq
    %v75 = vand.u32 %v74, 127
    %vm76 = vcmp.eq.s32.totalorder %v75, 0
    %vm77 = vcmask 253952
    %v78 = vsel %vm77, %v73, 0.0
    %79 = vadd.xlane.f32.xlu0 %v78
    %v80 = vpop.xlane.xlu0 %79
    %v81 = vrot.slane %v80, 4
    %v82 = vadd.f32 %v80, %v81
    %v83 = vrot.slane %v82, 2
    %v84 = vadd.f32 %v82, %v83
    %v85 = vrot.slane %v84, 1
    %v86 = vadd.f32 %v84, %v85
    %s87 = vtos %v86
    %v88 = vstv %s87
    %v89 = vsel %vm76, %v88, 0.0
    %90 = vst [vmem:[#allocation5] sm:$0x1] %v89
    // Predicated region
    $region18: #{tpu_custom_call.1} parent=1 // pred_check
      _
    $region19: #{tpu_custom_call.1} parent=1 // pred_check_branch
      %92 = sbr.rel (0) target = $region21
    $region20: #{tpu_custom_call.1} parent=1 // pred_region
      %s94 = ssub.s32 16, 16
      %95 = vsyncadd [#allocation4], %s94
      %s97 = sshll.u32 [#allocation5], 4
      %s98 = int_to_ptr.vmem [resolvable:$true] %s97
      %100 = dma.vmem_to_hbm [thread:$0]  %s98, 16, %s3, [#allocation4]
    $region21: #{tpu_custom_call.1} parent=1 // pred_fallthru
      _
    // Predicated region
    $region22: #{tpu_custom_call.1} parent=1 // pred_check
      _
    $region23: #{tpu_custom_call.1} parent=1 // pred_check_branch
      %102 = sbr.rel (0) target = $region25
    $region24: #{tpu_custom_call.1} parent=1 // pred_region
      %103 = dma.done [#allocation4], 16
    $region25: #{tpu_custom_call.1} parent=1 // pred_fallthru
      _
    %104 = vsyncpa [#allocation3], 1
    %105 = vsyncpa [#allocation4], 1

</llo_original>
